<compile_context>
chip_gen: v7x
topology: tpu7x:2x2x1
jax: 0.10.0
libtpu: 0.0.40
codegen_flags: <defaults>
</compile_context>

<pallas_src>
import jax
import jax.numpy as jnp
from jax.experimental import pallas as pl
from jax.experimental.pallas import tpu as pltpu

EPS = 1e-5


def _ceil_div(a, b):
    return -(-a // b)


def _make_adain_kernel(hw):
    """Kernel with the static spatial size closed over."""
    inv_n = 1.0 / float(hw)
    # torch.var default is unbiased (divide by n-1); clamp so hw==1 doesn't
    # blow up at trace time (torch would give NaN there anyway).
    inv_nm1 = 1.0 / float(max(hw - 1, 1))

    def kernel(x_ref, alpha_ref, beta_ref, o_ref):
        x = x_ref[...].astype(jnp.float32)            # (rb, HW), lane dim = full HW
        # Single pass over the block: sum and sum of squares.
        # var = (sum(x^2) - n*mean^2) / (n-1)   (unbiased)
        s1 = jnp.sum(x, axis=-1, keepdims=True)
        s2 = jnp.sum(x * x, axis=-1, keepdims=True)
        mean = s1 * inv_n
        var = jnp.maximum(s2 - s1 * mean, 0.0) * inv_nm1
        inv_std = jax.lax.rsqrt(var + EPS)            # EUP rsqrt, no divide

        a = alpha_ref[...].astype(jnp.float32)        # (rb, 1) per-step block
        b = beta_ref[...].astype(jnp.float32)

        # Fused normalize + affine: out = x*(a*inv_std) + (b - mean*a*inv_std)
        scale = a * inv_std
        shift = b - mean * scale
        o_ref[...] = (x * scale + shift).astype(o_ref.dtype)

    return kernel


def _choose_row_block(num_rows, hw, itemsize, target_block_bytes,
                      min_grid_steps, vmem_budget_bytes):
    """Biggest multiple-of-8 row tile that hits the HBM/VMEM budgets."""
    if num_rows <= 8:
        return num_rows
    # Rows per step from the HBM footprint of one x block (real itemsize,
    # so bf16 inputs get 2x the rows for the same DMA granularity).
    rb = max(8, (target_block_bytes // (hw * itemsize)) // 8 * 8)
    # Keep just enough steps for double-buffer pipelining.
    if num_rows >= 8 * min_grid_steps:
        rb = min(rb, max(8, (num_rows // min_grid_steps) // 8 * 8))
    # Cap so double-buffered in/out blocks plus f32 compute temporaries
    # (budgeted at 4 B/elt even for bf16 inputs) fit the VMEM budget.
    vmem_per_row = hw * (4 * itemsize + 8)
    rb_vmem = max(8, (vmem_budget_bytes // vmem_per_row) // 8 * 8)
    rb = min(rb, rb_vmem, (num_rows // 8) * 8)
    return int(max(8, rb))


def difficult_transform(feat, alpha, beta, *,
                        target_block_bytes=8 << 20, min_grid_steps=2,
                        vmem_budget_bytes=44 << 20):
    """feat: (N, C, H, W); alpha, beta broadcastable to (N, C, 1, 1)."""
    N, C, H, W = feat.shape
    R, HW = N * C, H * W

    x2d = feat.reshape(R, HW)          # contiguous reshape; no extra HBM pass

    # Per-(n, c) scale/shift columns; never materialize an (N,C,H,W) broadcast.
    alpha_col = jnp.broadcast_to(jnp.asarray(alpha, jnp.float32),
                                 (N, C, 1, 1)).reshape(R, 1)
    beta_col = jnp.broadcast_to(jnp.asarray(beta, jnp.float32),
                                (N, C, 1, 1)).reshape(R, 1)

    itemsize = int(jnp.dtype(feat.dtype).itemsize)
    headroom = 3 << 20
    rb = _choose_row_block(R, HW, itemsize, target_block_bytes,
                           min_grid_steps, vmem_budget_bytes - headroom)
    num_blocks = _ceil_div(R, rb)
    # Prefer an even step count so the "parallel" axis balances across v7x's
    # two TensorCores; no effect on single-TC v5e/v6e.
    if num_blocks > 1 and num_blocks % 2 == 1:
        rb_even = _ceil_div(_ceil_div(R, num_blocks + 1), 8) * 8
        if 8 <= rb_even <= rb and _ceil_div(R, rb_even) % 2 == 0:
            rb = rb_even
            num_blocks = _ceil_div(R, rb)

    # VMEM budget: double-buffered input + output blocks, f32 temporaries at
    # 4 B/elt, tiny alpha/beta blocks, plus compiler headroom.  Cap well below
    # v7x's 64 MiB physical VMEM.
    block_vmem = rb * HW * (4 * itemsize + 8) + 4 * rb * 4
    vmem_limit = int(min(max(block_vmem + headroom, 32 << 20), 48 << 20))

    kernel = _make_adain_kernel(HW)

    out2d = pl.pallas_call(
        kernel,
        out_shape=jax.ShapeDtypeStruct((R, HW), feat.dtype),
        grid_spec=pltpu.PrefetchScalarGridSpec(
            num_scalar_prefetch=0,
            grid=(num_blocks,),
            in_specs=[
                pl.BlockSpec((rb, HW), lambda i: (i, 0)),
                pl.BlockSpec((rb, 1), lambda i: (i, 0)),
                pl.BlockSpec((rb, 1), lambda i: (i, 0)),
            ],
            out_specs=pl.BlockSpec((rb, HW), lambda i: (i, 0)),
        ),
        compiler_params=pltpu.CompilerParams(
            dimension_semantics=("parallel",),
            vmem_limit_bytes=vmem_limit,
        ),
    )(x2d, alpha_col, beta_col)

    return out2d.reshape(N, C, H, W)


def _reference(feat, alpha, beta):
    N, C, H, W = feat.shape
    f = feat.reshape(N, C, -1)
    mean = f.mean(axis=2).reshape(N, C, 1, 1)
    var = f.var(axis=2, ddof=1).reshape(N, C, 1, 1) + EPS
    std = jnp.sqrt(var)
    y = (feat - mean) / std
    return y * jnp.broadcast_to(alpha, feat.shape) + jnp.broadcast_to(beta, feat.shape)


def _check(feat, alpha, beta):
    out = jax.block_until_ready(difficult_transform(feat, alpha, beta))
    ref = _reference(feat, alpha, beta)
    assert out.shape == feat.shape
    assert jnp.allclose(out, ref, atol=1e-4, rtol=1e-4)


if __name__ == "__main__":
    key = jax.random.PRNGKey(0)
    k_x, k_a, k_b, k_x2, k_x3, k_x4, k_a2, k_b2 = jax.random.split(key, 8)

    # Base case: aligned spatial size, per-channel affine params (1, C, 1, 1).
    N, C, H, W = 2, 4, 16, 16
    feat = jax.random.normal(k_x, (N, C, H, W), dtype=jnp.float32)
    alpha = jax.random.normal(k_a, (1, C, 1, 1), dtype=jnp.float32)
    beta = jax.random.normal(k_b, (1, C, 1, 1), dtype=jnp.float32)
    _check(feat, alpha, beta)

    # Non-128-multiple spatial size exercises the masked final-vreg store path.
    feat2 = jax.random.normal(k_x2, (N, C, 14, 14), dtype=jnp.float32)
    _check(feat2, alpha, beta)

    # Row count not a multiple of the row block -> partial (masked) last block.
    feat3 = jax.random.normal(k_x3, (3, C, 16, 16), dtype=jnp.float32)
    _check(feat3, alpha, beta)

    # Fewer than 8 rows -> full-extent (unpadded) sublane block.
    feat4 = jax.random.normal(k_x4, (1, 3, 8, 16), dtype=jnp.float32)
    alpha4 = jax.random.normal(k_a2, (1, 3, 1, 1), dtype=jnp.float32)
    beta4 = jax.random.normal(k_b2, (1, 3, 1, 1), dtype=jnp.float32)
    _check(feat4, alpha4, beta4)

    print("KERNEL_OK")
</pallas_src>

<mosaic_0001>
module attributes {stable_mosaic.version = 11 : i64} {
  func.func @kernel(%arg0: i32, %arg1: memref<8x256xf32, #tpu.memory_space<vmem>>, %arg2: memref<8x1xf32, #tpu.memory_space<vmem>>, %arg3: memref<8x1xf32, #tpu.memory_space<vmem>>, %arg4: memref<8x256xf32, #tpu.memory_space<vmem>>) attributes {dimension_semantics = [#tpu.dimension_semantics<parallel>], iteration_bounds = array<i64: 1>, scalar_prefetch = 0 : i64, scratch_operands = 0 : i64, tpu.core_type = #tpu.core_type<tc>, window_params = [{transform_indices = @transform_0, window_bounds = array<i64: 8, 256>}, {transform_indices = @transform_1, window_bounds = array<i64: 8, 1>}, {transform_indices = @transform_2, window_bounds = array<i64: 8, 1>}, {transform_indices = @transform_3, window_bounds = array<i64: 8, 256>}]} {
    %c0 = arith.constant 0 : index
    %c0_0 = arith.constant 0 : index
    %0 = vector.load %arg1[%c0, %c0_0] : memref<8x256xf32, #tpu.memory_space<vmem>>, vector<8x256xf32>
    %cst = arith.constant dense<0.000000e+00> : vector<8xf32>
    %1 = vector.multi_reduction <add>, %0, %cst [1] : vector<8x256xf32> to vector<8xf32>
    %2 = vector.shape_cast %1 : vector<8xf32> to vector<8x1xf32>
    %3 = arith.mulf %0, %0 : vector<8x256xf32>
    %cst_1 = arith.constant dense<0.000000e+00> : vector<8xf32>
    %4 = vector.multi_reduction <add>, %3, %cst_1 [1] : vector<8x256xf32> to vector<8xf32>
    %5 = vector.shape_cast %4 : vector<8xf32> to vector<8x1xf32>
    %cst_2 = arith.constant 3.906250e-03 : f32
    %6 = vector.broadcast %cst_2 : f32 to vector<8x1xf32>
    %7 = arith.mulf %2, %6 : vector<8x1xf32>
    %8 = arith.mulf %2, %7 : vector<8x1xf32>
    %9 = arith.subf %5, %8 : vector<8x1xf32>
    %cst_3 = arith.constant 0.000000e+00 : f32
    %10 = vector.broadcast %cst_3 : f32 to vector<8x1xf32>
    %11 = arith.maximumf %9, %10 : vector<8x1xf32>
    %cst_4 = arith.constant 0.00392156886 : f32
    %12 = vector.broadcast %cst_4 : f32 to vector<8x1xf32>
    %13 = arith.mulf %11, %12 : vector<8x1xf32>
    %cst_5 = arith.constant 9.99999974E-6 : f32
    %14 = vector.broadcast %cst_5 : f32 to vector<8x1xf32>
    %15 = arith.addf %13, %14 : vector<8x1xf32>
    %16 = math.rsqrt %15 : vector<8x1xf32>
    %c0_6 = arith.constant 0 : index
    %c0_7 = arith.constant 0 : index
    %17 = vector.load %arg2[%c0_6, %c0_7] : memref<8x1xf32, #tpu.memory_space<vmem>>, vector<8x1xf32>
    %c0_8 = arith.constant 0 : index
    %c0_9 = arith.constant 0 : index
    %18 = vector.load %arg3[%c0_8, %c0_9] : memref<8x1xf32, #tpu.memory_space<vmem>>, vector<8x1xf32>
    %19 = arith.mulf %17, %16 : vector<8x1xf32>
    %20 = arith.mulf %7, %19 : vector<8x1xf32>
    %21 = arith.subf %18, %20 : vector<8x1xf32>
    %22 = vector.broadcast %19 : vector<8x1xf32> to vector<8x256xf32>
    %23 = arith.mulf %0, %22 : vector<8x256xf32>
    %24 = vector.broadcast %21 : vector<8x1xf32> to vector<8x256xf32>
    %25 = arith.addf %23, %24 : vector<8x256xf32>
    %c0_10 = arith.constant 0 : index
    %c0_11 = arith.constant 0 : index
    %26 = vector.load %arg4[%c0_10, %c0_11] : memref<8x256xf32, #tpu.memory_space<vmem>>, vector<8x256xf32>
    tpu.vector_store %arg4[%c0_10, %c0_11], %25 {strides = array<i32>} : memref<8x256xf32, #tpu.memory_space<vmem>>, vector<8x256xf32>,
    return
  }
  func.func @transform_0(%arg0: i32) -> (i32, i32) {
    %c0_i32 = arith.constant 0 : i32
    %c0_i32_0 = arith.constant 0 : i32
    return %arg0, %c0_i32 : i32, i32
  }
  func.func @transform_1(%arg0: i32) -> (i32, i32) {
    %c0_i32 = arith.constant 0 : i32
    %c0_i32_0 = arith.constant 0 : i32
    return %arg0, %c0_i32 : i32, i32
  }
  func.func @transform_2(%arg0: i32) -> (i32, i32) {
    %c0_i32 = arith.constant 0 : i32
    %c0_i32_0 = arith.constant 0 : i32
    return %arg0, %c0_i32 : i32, i32
  }
  func.func @transform_3(%arg0: i32) -> (i32, i32) {
    %c0_i32 = arith.constant 0 : i32
    %c0_i32_0 = arith.constant 0 : i32
    return %arg0, %c0_i32 : i32, i32
  }
}

</mosaic_0001>

<llo_original>
// kernel: tpu_custom_call.1
$region0: #{tpu_custom_call.1}
  #allocation0 [shape = 'u32[]', space=smem, size = 0x4, offset = 0x4, fixed_abs, tag = 'smem constant byte address 0x4 - core index']
  #allocation1 [shape = 'u32[144,128]{1,0:T(1,128)}', space=vmem, size = 0x12000, scoped, tag = 'internal scratch']
  %s0 = inlined_call_operand.vmem [shape: f32[8,256], index: 0, kind: input, shape index: {}]
  %s1 = inlined_call_operand.vmem [shape: f32[8,1], index: 1, kind: input, shape index: {}]
  %s2 = inlined_call_operand.vmem [shape: f32[8,1], index: 2, kind: input, shape index: {}]
  %s3 = inlined_call_operand.hbm [shape: f32[8,256], index: 3, kind: output, shape index: {}]
  %s4 = sld [smem:[#allocation0]]
  $region22: #{tpu_custom_call.1} parent=0
    _
  %s6 = ssub.s32 1, %s4
  %s7 = scalar_select 0, %s6, %s4
  $region1: #{tpu_custom_call.1} parent=0
    #allocation2 [shape = 'u8[8192]{0}', space=vmem, size = 0x2000, scoped, tag = 'output window, operand 0, single buffered']
    #allocation3 [shape = 's32[1]{0}', space=sflag, size = 0x4, scoped, tag = 'scoped memory for tpu_custom_call.1']
    %8 = vsyncpa [#allocation3], 0
    // Predicated region
    $region2: #{tpu_custom_call.1} parent=1 // pred_check
      _
    $region3: #{tpu_custom_call.1} parent=1 // pred_check_branch
      %10 = sbr.rel (0) target = $region5
    $region4: #{tpu_custom_call.1} parent=1 // pred_region
      _
    $region5: #{tpu_custom_call.1} parent=1 // pred_fallthru
      _
    // Predicated region
    $region6: #{tpu_custom_call.1} parent=1 // pred_check
      _
    $region7: #{tpu_custom_call.1} parent=1 // pred_check_branch
      %12 = sbr.rel (0) target = $region9
    $region8: #{tpu_custom_call.1} parent=1 // pred_region
      _
    $region9: #{tpu_custom_call.1} parent=1 // pred_fallthru
      _
    // Predicated region
    $region10: #{tpu_custom_call.1} parent=1 // pred_check
      _
    $region11: #{tpu_custom_call.1} parent=1 // pred_check_branch
      %14 = sbr.rel (0) target = $region13
    $region12: #{tpu_custom_call.1} parent=1 // pred_region
      _
    $region13: #{tpu_custom_call.1} parent=1 // pred_fallthru
      _
    %v15 = vld [vmem:[%s0] sm:$0xff]
    %v16 = vld [vmem:[%s0 + $0x8] sm:$0xff]
    %v17 = vadd.f32 %v15, %v16
    %18 = vadd.xlane.f32.xlu0 %v17
    %v19 = vpop.xlane.xlu0 %18
    %v20 = vmul.f32 %v15, %v15
    %v21 = vmul.f32 %v16, %v16
    %v22 = vadd.f32 %v20, %v21
    %23 = vadd.xlane.f32.xlu0 %v22
    %v24 = vpop.xlane.xlu0 %23
    %v25 = vmul.f32 %v19, 0.00390625
    %v26 = vmul.f32 %v19, %v25
    %v27 = vsub.f32 %v24, %v26
    %v28 = vmax.f32 %v27, 0.0
    %v29 = vmul.f32 %v28, 0.003921569
    %v30 = vadd.f32 %v29, 1e-05
    %v31 = vrsqrt.pop %v30
    %v32 = vld [vmem:[%s1] sm:$0xff]
    %v33 = vld [vmem:[%s2] sm:$0xff]
    %v34 = vmul.f32 %v32, %v31
    %v35 = vmul.f32 %v25, %v34
    %v36 = vsub.f32 %v33, %v35
    %38 = vset.pattern.permute.xlu0 0
    %39 = vperm.xlu0 %38, %v34
    %v40 = vpop.permute.xlu0 %39
    %v42 = vmul.f32 %v15, %v40
    %v43 = vmul.f32 %v16, %v40
    %45 = vset.pattern.permute.xlu0 0
    %46 = vperm.xlu0 %45, %v36
    %v47 = vpop.permute.xlu0 %46
    %v49 = vadd.f32 %v42, %v47
    %v50 = vadd.f32 %v43, %v47
    %51 = vst [vmem:[#allocation2] sm:$0xff] %v49
    %52 = vst [vmem:[#allocation2 + $0x8] sm:$0xff] %v50
    // Predicated region
    $region14: #{tpu_custom_call.1} parent=1 // pred_check
      _
    $region15: #{tpu_custom_call.1} parent=1 // pred_check_branch
      %54 = sbr.rel (0) target = $region17
    $region16: #{tpu_custom_call.1} parent=1 // pred_region
      %s56 = ssub.s32 256, 256
      %57 = vsyncadd [#allocation3], %s56
      %s59 = sshll.u32 [#allocation2], 4
      %s60 = int_to_ptr.vmem [resolvable:$true] %s59
      %62 = dma.vmem_to_hbm [thread:$0]  %s60, 256, %s3, [#allocation3]
    $region17: #{tpu_custom_call.1} parent=1 // pred_fallthru
      _
    // Predicated region
    $region18: #{tpu_custom_call.1} parent=1 // pred_check
      _
    $region19: #{tpu_custom_call.1} parent=1 // pred_check_branch
      %64 = sbr.rel (0) target = $region21
    $region20: #{tpu_custom_call.1} parent=1 // pred_region
      %65 = dma.done [#allocation3], 256
    $region21: #{tpu_custom_call.1} parent=1 // pred_fallthru
      _
    %66 = vsyncpa [#allocation3], 1

</llo_original>
